<compile_context>
chip_gen: v7x
topology: tpu7x:2x2x1
jax: 0.10.0
libtpu: 0.0.40
codegen_flags: <defaults>
</compile_context>

<pallas_src>
import functools

import jax
import jax.numpy as jnp
from jax.experimental import pallas as pl
from jax.experimental.pallas import tpu as pltpu


def _round_up(n, m):
    return ((n + m - 1) // m) * m


def _node_pool_mlp_kernel(batch_ref, x_ref, w1_ref, b1_ref, w2_ref, b2_ref,
                          out_ref, sums_ref, *, feat_dim, num_tiles):
    """Tiled segment-sum (one-hot matmul on MXU) with fused mean + 2-layer MLP finalize."""
    k = pl.program_id(0)
    b_pad, tn = sums_ref.shape[0], x_ref.shape[0]

    @pl.when(k == 0)
    def _init():
        sums_ref[...] = jnp.zeros_like(sums_ref)

    # --- per-tile segment sum: one-hot (B_pad, TN) @ x_tile (TN, F_pad) on the MXU ---
    ids = batch_ref[...]                                            # (1, TN) int32 (pad rows = -1)
    rows = jax.lax.broadcasted_iota(jnp.int32, (b_pad, tn), 0)      # (B_pad, TN)
    onehot = (rows == ids).astype(x_ref.dtype)                      # 0/1 exact in bf16 too
    sums_ref[...] += jnp.dot(onehot, x_ref[...],
                             preferred_element_type=jnp.float32)    # f32 accumulator

    # --- finalize: mean divide + Linear -> ReLU -> Linear, lane-dense store ---
    @pl.when(k == num_tiles - 1)
    def _finalize():
        sums = sums_ref[...]                                        # (B_pad, F_pad) f32
        # counts were folded into the matmul as the ones column at index `feat_dim`
        col = jax.lax.broadcasted_iota(jnp.int32, sums.shape, 1)
        counts = jnp.sum(jnp.where(col == feat_dim, sums, 0.0), axis=1, keepdims=True)
        pooled = sums * pl.reciprocal(jnp.maximum(counts, 1.0), approx=True)

        h = jnp.dot(pooled.astype(w1_ref.dtype), w1_ref[...],
                    preferred_element_type=jnp.float32) + b1_ref[...]
        h = jnp.maximum(h, 0.0)
        out = jnp.dot(h.astype(w2_ref.dtype), w2_ref[...],
                      preferred_element_type=jnp.float32) + b2_ref[...]
        out_ref[...] = out.astype(out_ref.dtype)


def node_pooling_forward(x, batch, num_graphs, w1, b1, w2, b2, *, tile_nodes=512):
    """JAX wrapper mirroring NodePooling.forward(x, batch, device)."""
    if x is None:
        # PyTorch: x = torch.ones((N, 1)) -> mean pooling of ones is 1.0 per non-empty graph.
        # Degenerate F=1 path: cheaper to compute in plain JAX than to launch a kernel.
        counts = jax.ops.segment_sum(jnp.ones((batch.shape[0],), jnp.float32),
                                     batch.astype(jnp.int32), num_segments=num_graphs)
        pooled = (counts > 0).astype(jnp.float32)[:, None]          # (B, 1)
        h = jnp.maximum(pooled @ w1 + b1, 0.0)
        return h @ w2 + b2

    N, F = x.shape
    H = w1.shape[1]
    O = w2.shape[1]
    B = num_graphs

    # Lane/sublane-friendly padding. F gets +1 for the ones/count column.
    F_pad = _round_up(F + 1, 128)
    H_pad = _round_up(H, 128)
    O_pad = _round_up(O, 128)
    B_pad = _round_up(B, 8)

    # Node-axis tile: multiple of 128, sized for VMEM double-buffering (fits v5e/v6e/v7x
    # comfortably at the default here; raise tile_nodes for big F with vmem_limit below).
    TN = _round_up(min(tile_nodes, _round_up(N, 128)), 128)
    N_pad = _round_up(N, TN)
    num_tiles = N_pad // TN

    # Pad inputs. Padded node rows get batch id -1 (never matches any graph row).
    x_pad = jnp.zeros((N_pad, F_pad), x.dtype)
    x_pad = x_pad.at[:N, :F].set(x)
    x_pad = x_pad.at[:N, F].set(jnp.asarray(1.0, x.dtype))          # ones column -> counts

    batch_pad = jnp.full((1, N_pad), -1, jnp.int32)
    batch_pad = batch_pad.at[0, :N].set(batch.astype(jnp.int32))

    w1_pad = jnp.zeros((F_pad, H_pad), w1.dtype).at[:F, :H].set(w1)
    b1_pad = jnp.zeros((1, H_pad), b1.dtype).at[0, :H].set(b1)
    w2_pad = jnp.zeros((H_pad, O_pad), w2.dtype).at[:H, :O].set(w2)
    b2_pad = jnp.zeros((1, O_pad), b2.dtype).at[0, :O].set(b2)

    kernel = functools.partial(_node_pool_mlp_kernel, feat_dim=F, num_tiles=num_tiles)

    out_pad = pl.pallas_call(
        kernel,
        out_shape=jax.ShapeDtypeStruct((B_pad, O_pad), jnp.float32),
        grid_spec=pltpu.PrefetchScalarGridSpec(
            num_scalar_prefetch=0,
            grid=(num_tiles,),
            in_specs=[
                pl.BlockSpec((1, TN), lambda k: (0, k)),            # batch ids (tiled)
                pl.BlockSpec((TN, F_pad), lambda k: (k, 0)),        # node features (tiled)
                pl.BlockSpec((F_pad, H_pad), lambda k: (0, 0)),     # W1 (resident)
                pl.BlockSpec((1, H_pad), lambda k: (0, 0)),         # b1
                pl.BlockSpec((H_pad, O_pad), lambda k: (0, 0)),     # W2
                pl.BlockSpec((1, O_pad), lambda k: (0, 0)),         # b2
            ],
            out_specs=pl.BlockSpec((B_pad, O_pad), lambda k: (0, 0)),
            scratch_shapes=[pltpu.VMEM((B_pad, F_pad), jnp.float32)],
        ),
        compiler_params=pltpu.CompilerParams(
            dimension_semantics=("arbitrary",),          # node axis is a reduction
            vmem_limit_bytes=64 * 1024 * 1024,           # allow bigger tiles than scoped default
        ),
    )(batch_pad, x_pad, w1_pad, b1_pad, w2_pad, b2_pad)

    return out_pad[:B, :O]


def _reference(x, batch, num_graphs, w1, b1, w2, b2):
    """Pure-JAX reference for correctness check."""
    if x is None:
        x = jnp.ones((batch.shape[0], 1), dtype=jnp.float32)
    sums = jax.ops.segment_sum(x, batch, num_segments=num_graphs)
    counts = jax.ops.segment_sum(jnp.ones((x.shape[0],)), batch, num_segments=num_graphs)
    pooled = sums / jnp.maximum(counts, 1.0)[:, None]
    h = jnp.maximum(pooled @ w1 + b1, 0.0)
    return h @ w2 + b2


if __name__ == "__main__":
    key = jax.random.PRNGKey(0)
    k_x, k_w1, k_b1, k_w2, k_b2, k_x2, k_b2nd = jax.random.split(key, 7)

    # Small graph-batch shapes: 16 nodes, 8 features, 4 graphs, hidden 32, out 8.
    N, F, B, H, O = 16, 8, 4, 32, 8

    x = jax.random.normal(k_x, (N, F), dtype=jnp.float32)
    batch = jnp.sort(jnp.arange(N, dtype=jnp.int32) % B)

    w1 = jax.random.normal(k_w1, (F, H), dtype=jnp.float32) * 0.1
    b1 = jax.random.normal(k_b1, (H,), dtype=jnp.float32) * 0.01
    w2 = jax.random.normal(k_w2, (H, O), dtype=jnp.float32) * 0.1
    b2 = jax.random.normal(k_b2, (O,), dtype=jnp.float32) * 0.01

    out = jax.block_until_ready(node_pooling_forward(x, batch, B, w1, b1, w2, b2))
    ref = _reference(x, batch, B, w1, b1, w2, b2)
    assert out.shape == (B, O)
    # approx=True reciprocal on the mean -> slightly looser tolerance than exact divide
    assert jnp.allclose(out, ref, atol=2e-3, rtol=2e-3), "mismatch vs reference"

    # Multi-tile accumulation path (3 node tiles of 128).
    N2, B2 = 300, 5
    x2 = jax.random.normal(k_x2, (N2, F), dtype=jnp.float32)
    batch2 = jnp.sort(jax.random.randint(k_b2nd, (N2,), 0, B2).astype(jnp.int32))
    out2 = jax.block_until_ready(
        node_pooling_forward(x2, batch2, B2, w1, b1, w2, b2, tile_nodes=128))
    ref2 = _reference(x2, batch2, B2, w1, b1, w2, b2)
    assert out2.shape == (B2, O)
    assert jnp.allclose(out2, ref2, atol=2e-3, rtol=2e-3), "multi-tile mismatch vs reference"

    # `x is None` branch (x -> ones((N, 1))): handled in plain JAX (degenerate F=1 path).
    w1_1 = jax.random.normal(k_w1, (1, H), dtype=jnp.float32) * 0.1
    out_none = jax.block_until_ready(node_pooling_forward(None, batch, B, w1_1, b1, w2, b2))
    ref_none = _reference(None, batch, B, w1_1, b1, w2, b2)
    assert out_none.shape == (B, O)
    assert jnp.allclose(out_none, ref_none, atol=1e-5, rtol=1e-5), "x=None mismatch"

    print("KERNEL_OK")
</pallas_src>

<mosaic_0001>
module attributes {stable_mosaic.version = 11 : i64} {
  func.func @_node_pool_mlp_kernel(%arg0: i32, %arg1: memref<1x128xi32, #tpu.memory_space<vmem>>, %arg2: memref<128x128xf32, #tpu.memory_space<vmem>>, %arg3: memref<128x128xf32, #tpu.memory_space<vmem>>, %arg4: memref<1x128xf32, #tpu.memory_space<vmem>>, %arg5: memref<128x128xf32, #tpu.memory_space<vmem>>, %arg6: memref<1x128xf32, #tpu.memory_space<vmem>>, %arg7: memref<8x128xf32, #tpu.memory_space<vmem>>, %arg8: memref<8x128xf32, #tpu.memory_space<vmem>>) attributes {dimension_semantics = [#tpu.dimension_semantics<arbitrary>], iteration_bounds = array<i64: 1>, scalar_prefetch = 0 : i64, scratch_operands = 1 : i64, tpu.core_type = #tpu.core_type<tc>, window_params = [{transform_indices = @transform_0, window_bounds = array<i64: 1, 128>}, {transform_indices = @transform_1, window_bounds = array<i64: 128, 128>}, {pipeline_mode = #tpu.pipeline_mode<synchronous>, transform_indices = @transform_2, window_bounds = array<i64: 128, 128>}, {pipeline_mode = #tpu.pipeline_mode<synchronous>, transform_indices = @transform_3, window_bounds = array<i64: 1, 128>}, {pipeline_mode = #tpu.pipeline_mode<synchronous>, transform_indices = @transform_4, window_bounds = array<i64: 128, 128>}, {pipeline_mode = #tpu.pipeline_mode<synchronous>, transform_indices = @transform_5, window_bounds = array<i64: 1, 128>}, {pipeline_mode = #tpu.pipeline_mode<synchronous>, transform_indices = @transform_6, window_bounds = array<i64: 8, 128>}]} {
    %c0_i32 = arith.constant 0 : i32
    %0 = arith.cmpi eq, %arg0, %c0_i32 : i32
    %1 = arith.extui %0 : i1 to i32
    %c0_i32_0 = arith.constant 0 : i32
    %2 = arith.cmpi ne, %1, %c0_i32_0 : i32
    scf.if %2 {
      %cst_10 = arith.constant 0.000000e+00 : f32
      %17 = vector.broadcast %cst_10 : f32 to vector<8x128xf32>
      %c0_11 = arith.constant 0 : index
      %c0_12 = arith.constant 0 : index
      %18 = vector.load %arg8[%c0_11, %c0_12] : memref<8x128xf32, #tpu.memory_space<vmem>>, vector<8x128xf32>
      tpu.vector_store %arg8[%c0_11, %c0_12], %17 {strides = array<i32>} : memref<8x128xf32, #tpu.memory_space<vmem>>, vector<8x128xf32>,
    } else {
    }
    %c0 = arith.constant 0 : index
    %c0_1 = arith.constant 0 : index
    %3 = vector.load %arg1[%c0, %c0_1] : memref<1x128xi32, #tpu.memory_space<vmem>>, vector<1x128xi32>
    %4 = tpu.iota {dimensions = array<i32: 0>} : vector<8x128xi32>
    %5 = vector.broadcast %3 : vector<1x128xi32> to vector<8x128xi32>
    %6 = arith.cmpi eq, %4, %5 : vector<8x128xi32>
    %7 = arith.extui %6 : vector<8x128xi1> to vector<8x128xi32>
    %8 = arith.sitofp %7 : vector<8x128xi32> to vector<8x128xf32>
    %c0_2 = arith.constant 0 : index
    %c0_3 = arith.constant 0 : index
    %9 = vector.load %arg8[%c0_2, %c0_3] : memref<8x128xf32, #tpu.memory_space<vmem>>, vector<8x128xf32>
    %c0_4 = arith.constant 0 : index
    %c0_5 = arith.constant 0 : index
    %10 = vector.load %arg2[%c0_4, %c0_5] : memref<128x128xf32, #tpu.memory_space<vmem>>, vector<128x128xf32>
    %cst = arith.constant dense<0.000000e+00> : vector<8x128xf32>
    %11 = tpu.matmul %8, %10, %cst {dimension_numbers = #tpu.dot_dimension_numbers<[1], [0], [0], [1], [0, 0, 1, 1], [], []>} : vector<8x128xf32>, vector<128x128xf32>, vector<8x128xf32> -> vector<8x128xf32>
    %12 = arith.addf %9, %11 : vector<8x128xf32>
    %c0_6 = arith.constant 0 : index
    %c0_7 = arith.constant 0 : index
    %13 = vector.load %arg8[%c0_6, %c0_7] : memref<8x128xf32, #tpu.memory_space<vmem>>, vector<8x128xf32>
    tpu.vector_store %arg8[%c0_6, %c0_7], %12 {strides = array<i32>} : memref<8x128xf32, #tpu.memory_space<vmem>>, vector<8x128xf32>,
    %c0_i32_8 = arith.constant 0 : i32
    %14 = arith.cmpi eq, %arg0, %c0_i32_8 : i32
    %15 = arith.extui %14 : i1 to i32
    %c0_i32_9 = arith.constant 0 : i32
    %16 = arith.cmpi ne, %15, %c0_i32_9 : i32
    scf.if %16 {
      %c0_10 = arith.constant 0 : index
      %c0_11 = arith.constant 0 : index
      %17 = vector.load %arg8[%c0_10, %c0_11] : memref<8x128xf32, #tpu.memory_space<vmem>>, vector<8x128xf32>
      %18 = tpu.iota {dimensions = array<i32: 1>} : vector<8x128xi32>
      %c8_i32 = arith.constant 8 : i32
      %19 = vector.broadcast %c8_i32 : i32 to vector<8x128xi32>
      %20 = arith.cmpi eq, %18, %19 : vector<8x128xi32>
      %cst_12 = arith.constant 0.000000e+00 : f32
      %21 = vector.broadcast %cst_12 : f32 to vector<8x128xf32>
      %22 = arith.select %20, %17, %21 : vector<8x128xi1>, vector<8x128xf32>
      %cst_13 = arith.constant dense<0.000000e+00> : vector<8xf32>
      %23 = vector.multi_reduction <add>, %22, %cst_13 [1] : vector<8x128xf32> to vector<8xf32>
      %24 = vector.shape_cast %23 : vector<8xf32> to vector<8x1xf32>
      %cst_14 = arith.constant 1.000000e+00 : f32
      %25 = vector.broadcast %cst_14 : f32 to vector<8x1xf32>
      %26 = arith.maximumf %24, %25 : vector<8x1xf32>
      %27 = tpu.reciprocal %26 {approx = true} : vector<8x1xf32> -> vector<8x1xf32>
      %28 = vector.broadcast %27 : vector<8x1xf32> to vector<8x128xf32>
      %29 = arith.mulf %17, %28 : vector<8x128xf32>
      %c0_15 = arith.constant 0 : index
      %c0_16 = arith.constant 0 : index
      %30 = vector.load %arg3[%c0_15, %c0_16] : memref<128x128xf32, #tpu.memory_space<vmem>>, vector<128x128xf32>
      %cst_17 = arith.constant dense<0.000000e+00> : vector<8x128xf32>
      %31 = tpu.matmul %29, %30, %cst_17 {dimension_numbers = #tpu.dot_dimension_numbers<[1], [0], [0], [1], [0, 0, 1, 1], [], []>} : vector<8x128xf32>, vector<128x128xf32>, vector<8x128xf32> -> vector<8x128xf32>
      %c0_18 = arith.constant 0 : index
      %c0_19 = arith.constant 0 : index
      %32 = vector.load %arg4[%c0_18, %c0_19] : memref<1x128xf32, #tpu.memory_space<vmem>>, vector<1x128xf32>
      %33 = vector.broadcast %32 : vector<1x128xf32> to vector<8x128xf32>
      %34 = arith.addf %31, %33 : vector<8x128xf32>
      %cst_20 = arith.constant 0.000000e+00 : f32
      %35 = vector.broadcast %cst_20 : f32 to vector<8x128xf32>
      %36 = arith.maximumf %34, %35 : vector<8x128xf32>
      %c0_21 = arith.constant 0 : index
      %c0_22 = arith.constant 0 : index
      %37 = vector.load %arg5[%c0_21, %c0_22] : memref<128x128xf32, #tpu.memory_space<vmem>>, vector<128x128xf32>
      %cst_23 = arith.constant dense<0.000000e+00> : vector<8x128xf32>
      %38 = tpu.matmul %36, %37, %cst_23 {dimension_numbers = #tpu.dot_dimension_numbers<[1], [0], [0], [1], [0, 0, 1, 1], [], []>} : vector<8x128xf32>, vector<128x128xf32>, vector<8x128xf32> -> vector<8x128xf32>
      %c0_24 = arith.constant 0 : index
      %c0_25 = arith.constant 0 : index
      %39 = vector.load %arg6[%c0_24, %c0_25] : memref<1x128xf32, #tpu.memory_space<vmem>>, vector<1x128xf32>
      %40 = vector.broadcast %39 : vector<1x128xf32> to vector<8x128xf32>
      %41 = arith.addf %38, %40 : vector<8x128xf32>
      %c0_26 = arith.constant 0 : index
      %c0_27 = arith.constant 0 : index
      %42 = vector.load %arg7[%c0_26, %c0_27] : memref<8x128xf32, #tpu.memory_space<vmem>>, vector<8x128xf32>
      tpu.vector_store %arg7[%c0_26, %c0_27], %41 {strides = array<i32>} : memref<8x128xf32, #tpu.memory_space<vmem>>, vector<8x128xf32>,
    } else {
    }
    return
  }
  func.func @transform_0(%arg0: i32) -> (i32, i32) {
    %c0_i32 = arith.constant 0 : i32
    %c0_i32_0 = arith.constant 0 : i32
    return %c0_i32, %arg0 : i32, i32
  }
  func.func @transform_1(%arg0: i32) -> (i32, i32) {
    %c0_i32 = arith.constant 0 : i32
    %c0_i32_0 = arith.constant 0 : i32
    return %arg0, %c0_i32 : i32, i32
  }
  func.func @transform_2(%arg0: i32) -> (i32, i32) {
    %c0_i32 = arith.constant 0 : i32
    %c0_i32_0 = arith.constant 0 : i32
    %c0_i32_1 = arith.constant 0 : i32
    return %c0_i32, %c0_i32_0 : i32, i32
  }
  func.func @transform_3(%arg0: i32) -> (i32, i32) {
    %c0_i32 = arith.constant 0 : i32
    %c0_i32_0 = arith.constant 0 : i32
    %c0_i32_1 = arith.constant 0 : i32
    return %c0_i32, %c0_i32_0 : i32, i32
  }
  func.func @transform_4(%arg0: i32) -> (i32, i32) {
    %c0_i32 = arith.constant 0 : i32
    %c0_i32_0 = arith.constant 0 : i32
    %c0_i32_1 = arith.constant 0 : i32
    return %c0_i32, %c0_i32_0 : i32, i32
  }
  func.func @transform_5(%arg0: i32) -> (i32, i32) {
    %c0_i32 = arith.constant 0 : i32
    %c0_i32_0 = arith.constant 0 : i32
    %c0_i32_1 = arith.constant 0 : i32
    return %c0_i32, %c0_i32_0 : i32, i32
  }
  func.func @transform_6(%arg0: i32) -> (i32, i32) {
    %c0_i32 = arith.constant 0 : i32
    %c0_i32_0 = arith.constant 0 : i32
    %c0_i32_1 = arith.constant 0 : i32
    return %c0_i32, %c0_i32_0 : i32, i32
  }
}

</mosaic_0001>

<llo_original>
// kernel: tpu_custom_call.1
$region0: #{tpu_custom_call.1}
  #allocation0 [shape = 'u32[]', space=smem, size = 0x4, offset = 0x4, fixed_abs, tag = 'smem constant byte address 0x4 - core index']
  #allocation1 [shape = 'u32[144,128]{1,0:T(1,128)}', space=vmem, size = 0x12000, scoped, tag = 'internal scratch']
  #allocation2 [shape = 'f32[8,128]{1,0:T(8,128)}', space=vmem, size = 0x1000, scoped, tag = 'scratch operand']
  %s0 = inlined_call_operand.hbm [shape: s32[1,128], index: 0, kind: input, shape index: {}]
  %s1 = inlined_call_operand.hbm [shape: f32[128,128], index: 1, kind: input, shape index: {}]
  %s2 = inlined_call_operand.hbm [shape: f32[128,128], index: 2, kind: input, shape index: {}]
  %s3 = inlined_call_operand.hbm [shape: f32[1,128], index: 3, kind: input, shape index: {}]
  %s4 = inlined_call_operand.hbm [shape: f32[128,128], index: 4, kind: input, shape index: {}]
  %s5 = inlined_call_operand.hbm [shape: f32[1,128], index: 5, kind: input, shape index: {}]
  %s6 = inlined_call_operand.hbm [shape: f32[8,128], index: 6, kind: output, shape index: {}]
  %s7 = sld [smem:[#allocation0]]
  $region66: #{tpu_custom_call.1} parent=0
    _
  %s9 = ssub.s32 1, %s7
  %s10 = scalar_select 0, %s9, %s7
  $region1: #{tpu_custom_call.1} parent=0
    #allocation3 [shape = 'u8[512]{0}', space=vmem, size = 0x400, scoped, tag = 'input window, operand 0, single buffered']
    #allocation4 [shape = 's32[1]{0}', space=sflag, size = 0x4, scoped, tag = 'scoped memory for tpu_custom_call.1']
    #allocation5 [shape = 's32[1]{0}', space=sflag, size = 0x4, scoped, tag = 'scoped memory for tpu_custom_call.1']
    #allocation6 [shape = 'u8[65536]{0}', space=vmem, size = 0x10000, scoped, tag = 'input window, operand 1, single buffered']
    #allocation7 [shape = 's32[1]{0}', space=sflag, size = 0x4, scoped, tag = 'scoped memory for tpu_custom_call.1']
    #allocation8 [shape = 'u8[65536]{0}', space=vmem, size = 0x10000, scoped, tag = 'input window, operand 2, single buffered']
    #allocation9 [shape = 'u8[512]{0}', space=vmem, size = 0x400, scoped, tag = 'input window, operand 3, single buffered']
    #allocation10 [shape = 's32[1]{0}', space=sflag, size = 0x4, scoped, tag = 'scoped memory for tpu_custom_call.1']
    #allocation11 [shape = 'u8[65536]{0}', space=vmem, size = 0x10000, scoped, tag = 'input window, operand 4, single buffered']
    #allocation12 [shape = 'u8[512]{0}', space=vmem, size = 0x400, scoped, tag = 'input window, operand 5, single buffered']
    #allocation13 [shape = 's32[1]{0}', space=sflag, size = 0x4, scoped, tag = 'scoped memory for tpu_custom_call.1']
    #allocation14 [shape = 'u8[4096]{0}', space=vmem, size = 0x1000, scoped, tag = 'output window, operand 0, single buffered']
    %11 = vsyncpa [#allocation4], 0
    %12 = vsyncpa [#allocation7], 0
    %13 = vsyncpa [#allocation10], 0
    %14 = vsyncpa [#allocation13], 0
    %15 = vsyncpa [#allocation5], 0
    // Predicated region
    $region2: #{tpu_custom_call.1} parent=1 // pred_check
      _
    $region3: #{tpu_custom_call.1} parent=1 // pred_check_branch
      %17 = sbr.rel (0) target = $region5
    $region4: #{tpu_custom_call.1} parent=1 // pred_region
      %s19 = ssub.s32 16, 16
      %20 = vsyncadd [#allocation4], %s19
      %s22 = sshll.u32 [#allocation3], 4
      %s23 = int_to_ptr.vmem [resolvable:$true] %s22
      %25 = dma.hbm_to_vmem [thread:$0]  %s0, 16, %s23, [#allocation4]
    $region5: #{tpu_custom_call.1} parent=1 // pred_fallthru
      _
    // Predicated region
    $region6: #{tpu_custom_call.1} parent=1 // pred_check
      _
    $region7: #{tpu_custom_call.1} parent=1 // pred_check_branch
      %27 = sbr.rel (0) target = $region9
    $region8: #{tpu_custom_call.1} parent=1 // pred_region
      %s29 = ssub.s32 2048, 2048
      %30 = vsyncadd [#allocation7], %s29
      %s31 = sshll.u32 [#allocation6], 4
      %s32 = int_to_ptr.vmem [resolvable:$true] %s31
      %37 = dma.hbm_to_vmem [thread:$0]  %s1, 2048, %s32, [#allocation7], 128, 128, 8
    $region9: #{tpu_custom_call.1} parent=1 // pred_fallthru
      _
    // Predicated region
    $region10: #{tpu_custom_call.1} parent=1 // pred_check
      _
    $region11: #{tpu_custom_call.1} parent=1 // pred_check_branch
      %39 = sbr.rel (0) target = $region13
    $region12: #{tpu_custom_call.1} parent=1 // pred_region
      %s41 = ssub.s32 2048, 2048
      %42 = vsyncadd [#allocation7], %s41
      %s43 = sshll.u32 [#allocation8], 4
      %s44 = int_to_ptr.vmem [resolvable:$true] %s43
      %49 = dma.hbm_to_vmem [thread:$0]  %s2, 2048, %s44, [#allocation7], 128, 128, 8
    $region13: #{tpu_custom_call.1} parent=1 // pred_fallthru
      _
    // Predicated region
    $region14: #{tpu_custom_call.1} parent=1 // pred_check
      _
    $region15: #{tpu_custom_call.1} parent=1 // pred_check_branch
      %51 = sbr.rel (0) target = $region17
    $region16: #{tpu_custom_call.1} parent=1 // pred_region
      %s53 = ssub.s32 16, 16
      %54 = vsyncadd [#allocation10], %s53
      %s56 = sshll.u32 [#allocation9], 4
      %s57 = int_to_ptr.vmem [resolvable:$true] %s56
      %59 = dma.hbm_to_vmem [thread:$0]  %s3, 16, %s57, [#allocation10]
    $region17: #{tpu_custom_call.1} parent=1 // pred_fallthru
      _
    // Predicated region
    $region18: #{tpu_custom_call.1} parent=1 // pred_check
      _
    $region19: #{tpu_custom_call.1} parent=1 // pred_check_branch
      %61 = sbr.rel (0) target = $region21
    $region20: #{tpu_custom_call.1} parent=1 // pred_region
      %s63 = ssub.s32 2048, 2048
      %64 = vsyncadd [#allocation10], %s63
      %s65 = sshll.u32 [#allocation11], 4
      %s66 = int_to_ptr.vmem [resolvable:$true] %s65
      %71 = dma.hbm_to_vmem [thread:$0]  %s4, 2048, %s66, [#allocation10], 128, 128, 8
    $region21: #{tpu_custom_call.1} parent=1 // pred_fallthru
      _
    // Predicated region
    $region22: #{tpu_custom_call.1} parent=1 // pred_check
      _
    $region23: #{tpu_custom_call.1} parent=1 // pred_check_branch
      %73 = sbr.rel (0) target = $region25
    $region24: #{tpu_custom_call.1} parent=1 // pred_region
      %s75 = ssub.s32 16, 16
      %76 = vsyncadd [#allocation13], %s75
      %s78 = sshll.u32 [#allocation12], 4
      %s79 = int_to_ptr.vmem [resolvable:$true] %s78
      %81 = dma.hbm_to_vmem [thread:$0]  %s5, 16, %s79, [#allocation13]
    $region25: #{tpu_custom_call.1} parent=1 // pred_fallthru
      _
    // Predicated region
    $region26: #{tpu_custom_call.1} parent=1 // pred_check
      _
    $region27: #{tpu_custom_call.1} parent=1 // pred_check_branch
      %83 = sbr.rel (0) target = $region29
    $region28: #{tpu_custom_call.1} parent=1 // pred_region
      %84 = dma.done [#allocation4], 16
    $region29: #{tpu_custom_call.1} parent=1 // pred_fallthru
      _
    // Predicated region
    $region30: #{tpu_custom_call.1} parent=1 // pred_check
      _
    $region31: #{tpu_custom_call.1} parent=1 // pred_check_branch
      %86 = sbr.rel (0) target = $region33
    $region32: #{tpu_custom_call.1} parent=1 // pred_region
      %87 = dma.done [#allocation7], 2048
    $region33: #{tpu_custom_call.1} parent=1 // pred_fallthru
      _
    // Predicated region
    $region34: #{tpu_custom_call.1} parent=1 // pred_check
      _
    $region35: #{tpu_custom_call.1} parent=1 // pred_check_branch
      %89 = sbr.rel (0) target = $region37
    $region36: #{tpu_custom_call.1} parent=1 // pred_region
      %90 = dma.done [#allocation7], 2048
    $region37: #{tpu_custom_call.1} parent=1 // pred_fallthru
      _
    // Predicated region
    $region38: #{tpu_custom_call.1} parent=1 // pred_check
      _
    $region39: #{tpu_custom_call.1} parent=1 // pred_check_branch
      %92 = sbr.rel (0) target = $region41
    $region40: #{tpu_custom_call.1} parent=1 // pred_region
      %93 = dma.done [#allocation10], 16
    $region41: #{tpu_custom_call.1} parent=1 // pred_fallthru
      _
    // Predicated region
    $region42: #{tpu_custom_call.1} parent=1 // pred_check
      _
    $region43: #{tpu_custom_call.1} parent=1 // pred_check_branch
      %95 = sbr.rel (0) target = $region45
    $region44: #{tpu_custom_call.1} parent=1 // pred_region
      %96 = dma.done [#allocation10], 2048
    $region45: #{tpu_custom_call.1} parent=1 // pred_fallthru
      _
    // Predicated region
    $region46: #{tpu_custom_call.1} parent=1 // pred_check
      _
    $region47: #{tpu_custom_call.1} parent=1 // pred_check_branch
      %98 = sbr.rel (0) target = $region49
    $region48: #{tpu_custom_call.1} parent=1 // pred_region
      %99 = dma.done [#allocation13], 16
    $region49: #{tpu_custom_call.1} parent=1 // pred_fallthru
      _
    %p100 = scmp.eq.s32.totalorder 0, 0
    // Predicated region
    $region50: #{tpu_custom_call.1} parent=1 // pred_check
      %p101 = pneg %p100
    $region51: #{tpu_custom_call.1} parent=1 // pred_check_branch
      %103 = sbr.rel (%p101) target = $region53
    $region52: #{tpu_custom_call.1} parent=1 // pred_region
      %104 = vst [vmem:[#allocation2] sm:$0xff] 0.0
    $region53: #{tpu_custom_call.1} parent=1 // pred_fallthru
      _
    %v105 = vld [vmem:[#allocation3] sm:$0x1]
    %v106 = vlaneseq
    %v107 = vshrl.u32 %v106, 7
    %v108 = vlaneseq
    %v109 = vshrl.u32 %v108, 7
    %v110 = vsub.s32 0, %v109
    %v111 = vrot.slane %v105, %v110
    %vm112 = vcmp.eq.s32.totalorder %v107, %v111
    %v113 = vsel %vm112, 1, 0
    %v114 = vcvt.s32.f32 %v113
    %v115 = vld [vmem:[#allocation2] sm:$0xff]
    %v116 = vld [vmem:[#allocation6] sm:$0xff]
    %v117 = vld [vmem:[#allocation6 + $0x8] sm:$0xff]
    %v118 = vld [vmem:[#allocation6 + $0x10] sm:$0xff]
    %v119 = vld [vmem:[#allocation6 + $0x18] sm:$0xff]
    %v120 = vld [vmem:[#allocation6 + $0x20] sm:$0xff]
    %v121 = vld [vmem:[#allocation6 + $0x28] sm:$0xff]
    %v122 = vld [vmem:[#allocation6 + $0x30] sm:$0xff]
    %v123 = vld [vmem:[#allocation6 + $0x38] sm:$0xff]
    %v124 = vld [vmem:[#allocation6 + $0x40] sm:$0xff]
    %v125 = vld [vmem:[#allocation6 + $0x48] sm:$0xff]
    %v126 = vld [vmem:[#allocation6 + $0x50] sm:$0xff]
    %v127 = vld [vmem:[#allocation6 + $0x58] sm:$0xff]
    %v128 = vld [vmem:[#allocation6 + $0x60] sm:$0xff]
    %v129 = vld [vmem:[#allocation6 + $0x68] sm:$0xff]
    %v130 = vld [vmem:[#allocation6 + $0x70] sm:$0xff]
    %v131 = vld [vmem:[#allocation6 + $0x78] sm:$0xff]
    %132 = vmatprep.subr.mxu0 0.0
    %133 = vmatpush1.msra.mxu0 %v116
    %134 = vmatprep.subr.mxu0 0.0
    %135 = vmatpush1.msra.mxu0 %v117
    %136 = vmatprep.subr.mxu0 0.0
    %137 = vmatpush1.msra.mxu0 %v118
    %138 = vmatprep.subr.mxu0 0.0
    %139 = vmatpush1.msra.mxu0 %v119
    %140 = vmatprep.subr.mxu0 0.0
    %141 = vmatpush1.msra.mxu0 %v120
    %142 = vmatprep.subr.mxu0 0.0
    %143 = vmatpush1.msra.mxu0 %v121
    %144 = vmatprep.subr.mxu0 0.0
    %145 = vmatpush1.msra.mxu0 %v122
    %146 = vmatprep.subr.mxu0 0.0
    %147 = vmatpush1.msra.mxu0 %v123
    %148 = vmatprep.subr.mxu0 0.0
    %149 = vmatpush1.msra.mxu0 %v124
    %150 = vmatprep.subr.mxu0 0.0
    %151 = vmatpush1.msra.mxu0 %v125
    %152 = vmatprep.subr.mxu0 0.0
    %153 = vmatpush1.msra.mxu0 %v126
    %154 = vmatprep.subr.mxu0 0.0
    %155 = vmatpush1.msra.mxu0 %v127
    %156 = vmatprep.subr.mxu0 0.0
    %157 = vmatpush1.msra.mxu0 %v128
    %158 = vmatprep.subr.mxu0 0.0
    %159 = vmatpush1.msra.mxu0 %v129
    %160 = vmatprep.subr.mxu0 0.0
    %161 = vmatpush1.msra.mxu0 %v130
    %162 = vmatprep.subr.mxu0 0.0
    %163 = vmatpush1.msra.mxu0 %v131
    %164 = vmatprep.subr.mxu0 0.0
    %165 = vmatpush1.msra.mxu0 0.0
    %166 = vmatprep.subr.mxu0 0.0
    %167 = vmatpush1.msra.mxu0 0.0
    %168 = vmatprep.subr.mxu0 0.0
    %169 = vmatpush1.msra.mxu0 0.0
    %170 = vmatprep.subr.mxu0 0.0
    %171 = vmatpush1.msra.mxu0 0.0
    %172 = vmatprep.subr.mxu0 0.0
    %173 = vmatpush1.msra.mxu0 0.0
    %174 = vmatprep.subr.mxu0 0.0
    %175 = vmatpush1.msra.mxu0 0.0
    %176 = vmatprep.subr.mxu0 0.0
    %177 = vmatpush1.msra.mxu0 0.0
    %178 = vmatprep.subr.mxu0 0.0
    %179 = vmatpush1.msra.mxu0 0.0
    %180 = vmatprep.subr.mxu0 0.0
    %181 = vmatpush1.msra.mxu0 0.0
    %182 = vmatprep.subr.mxu0 0.0
    %183 = vmatpush1.msra.mxu0 0.0
    %184 = vmatprep.subr.mxu0 0.0
    %185 = vmatpush1.msra.mxu0 0.0
    %186 = vmatprep.subr.mxu0 0.0
    %187 = vmatpush1.msra.mxu0 0.0
    %188 = vmatprep.subr.mxu0 0.0
    %189 = vmatpush1.msra.mxu0 0.0
    %190 = vmatprep.subr.mxu0 0.0
    %191 = vmatpush1.msra.mxu0 0.0
    %192 = vmatprep.subr.mxu0 0.0
    %193 = vmatpush1.msra.mxu0 0.0
    %194 = vmatprep.subr.mxu0 0.0
    %195 = vmatpush1.msra.mxu0 0.0
    %196 = vmatprep.mubr.f32.mxu0 0.0
    %197 = vmatmul.mubr.f32.gmra.mrb[0].mxu0 %v114
    %v198 = vpop.f32.mrb[0].mxu0
    %v199 = vadd.f32 0.0, %v198
    %v200 = vpop.f32.mrb[0].mxu0
    %201 = vdwg.mxu0
    %v202 = vadd.f32 %v115, %v199
    %203 = vst [vmem:[#allocation2] sm:$0xff] %v202
    // Predicated region
    $region54: #{tpu_custom_call.1} parent=1 // pred_check
      %p204 = pneg %p100
    $region55: #{tpu_custom_call.1} parent=1 // pred_check_branch
      %206 = sbr.rel (%p204) target = $region57
    $region56: #{tpu_custom_call.1} parent=1 // pred_region
      %v207 = vld [vmem:[#allocation2] sm:$0xff]
      %v208 = vlaneseq
      %v209 = vand.u32 %v208, 127
      %vm210 = vcmp.eq.s32.totalorder %v209, 8
      %v211 = vsel %vm210, %v207, 0.0
      %212 = vadd.xlane.f32.xlu0 %v211
      %v213 = vpop.xlane.xlu0 %212
      %v214 = vmax.f32 %v213, 1.0
      %v215 = vrcp.pop %v214
      %v216 = vmul.f32 %v207, %v215
      %v217 = vld [vmem:[#allocation8] sm:$0xff]
      %v218 = vld [vmem:[#allocation8 + $0x8] sm:$0xff]
      %v219 = vld [vmem:[#allocation8 + $0x10] sm:$0xff]
      %v220 = vld [vmem:[#allocation8 + $0x18] sm:$0xff]
      %v221 = vld [vmem:[#allocation8 + $0x20] sm:$0xff]
      %v222 = vld [vmem:[#allocation8 + $0x28] sm:$0xff]
      %v223 = vld [vmem:[#allocation8 + $0x30] sm:$0xff]
      %v224 = vld [vmem:[#allocation8 + $0x38] sm:$0xff]
      %v225 = vld [vmem:[#allocation8 + $0x40] sm:$0xff]
      %v226 = vld [vmem:[#allocation8 + $0x48] sm:$0xff]
      %v227 = vld [vmem:[#allocation8 + $0x50] sm:$0xff]
      %v228 = vld [vmem:[#allocation8 + $0x58] sm:$0xff]
      %v229 = vld [vmem:[#allocation8 + $0x60] sm:$0xff]
      %v230 = vld [vmem:[#allocation8 + $0x68] sm:$0xff]
      %v231 = vld [vmem:[#allocation8 + $0x70] sm:$0xff]
      %v232 = vld [vmem:[#allocation8 + $0x78] sm:$0xff]
      %v233 = vld [vmem:[#allocation9] sm:$0x1]
      %v235 = vlaneseq
      %v236 = vshrl.u32 %v235, 7
      %v237 = vsub.s32 0, %v236
      %v238 = vrot.slane %v233, %v237
      %240 = vmatprep.subr.mxu0 0.0
      %241 = vmatpush1.msra.mxu0 %v217
      %242 = vmatprep.subr.mxu0 0.0
      %243 = vmatpush1.msra.mxu0 %v218
      %244 = vmatprep.subr.mxu0 0.0
      %245 = vmatpush1.msra.mxu0 %v219
      %246 = vmatprep.subr.mxu0 0.0
      %247 = vmatpush1.msra.mxu0 %v220
      %248 = vmatprep.subr.mxu0 0.0
      %249 = vmatpush1.msra.mxu0 %v221
      %250 = vmatprep.subr.mxu0 0.0
      %251 = vmatpush1.msra.mxu0 %v222
      %252 = vmatprep.subr.mxu0 0.0
      %253 = vmatpush1.msra.mxu0 %v223
      %254 = vmatprep.subr.mxu0 0.0
      %255 = vmatpush1.msra.mxu0 %v224
      %256 = vmatprep.subr.mxu0 0.0
      %257 = vmatpush1.msra.mxu0 %v225
      %258 = vmatprep.subr.mxu0 0.0
      %259 = vmatpush1.msra.mxu0 %v226
      %260 = vmatprep.subr.mxu0 0.0
      %261 = vmatpush1.msra.mxu0 %v227
      %262 = vmatprep.subr.mxu0 0.0
      %263 = vmatpush1.msra.mxu0 %v228
      %264 = vmatprep.subr.mxu0 0.0
      %265 = vmatpush1.msra.mxu0 %v229
      %266 = vmatprep.subr.mxu0 0.0
      %267 = vmatpush1.msra.mxu0 %v230
      %268 = vmatprep.subr.mxu0 0.0
      %269 = vmatpush1.msra.mxu0 %v231
      %270 = vmatprep.subr.mxu0 0.0
      %271 = vmatpush1.msra.mxu0 %v232
      %272 = vmatprep.subr.mxu0 0.0
      %273 = vmatpush1.msra.mxu0 0.0
      %274 = vmatprep.subr.mxu0 0.0
      %275 = vmatpush1.msra.mxu0 0.0
      %276 = vmatprep.subr.mxu0 0.0
      %277 = vmatpush1.msra.mxu0 0.0
      %278 = vmatprep.subr.mxu0 0.0
      %279 = vmatpush1.msra.mxu0 0.0
      %280 = vmatprep.subr.mxu0 0.0
      %281 = vmatpush1.msra.mxu0 0.0
      %282 = vmatprep.subr.mxu0 0.0
      %283 = vmatpush1.msra.mxu0 0.0
      %284 = vmatprep.subr.mxu0 0.0
      %285 = vmatpush1.msra.mxu0 0.0
      %286 = vmatprep.subr.mxu0 0.0
      %287 = vmatpush1.msra.mxu0 0.0
      %288 = vmatprep.subr.mxu0 0.0
      %289 = vmatpush1.msra.mxu0 0.0
      %290 = vmatprep.subr.mxu0 0.0
      %291 = vmatpush1.msra.mxu0 0.0
      %292 = vmatprep.subr.mxu0 0.0
      %293 = vmatpush1.msra.mxu0 0.0
      %294 = vmatprep.subr.mxu0 0.0
      %295 = vmatpush1.msra.mxu0 0.0
      %296 = vmatprep.subr.mxu0 0.0
      %297 = vmatpush1.msra.mxu0 0.0
      %298 = vmatprep.subr.mxu0 0.0
      %299 = vmatpush1.msra.mxu0 0.0
      %300 = vmatprep.subr.mxu0 0.0
      %301 = vmatpush1.msra.mxu0 0.0
      %302 = vmatprep.subr.mxu0 0.0
      %303 = vmatpush1.msra.mxu0 0.0
      %304 = vmatprep.mubr.f32.mxu0 0.0
      %305 = vmatmul.mubr.f32.gmra.mrb[0].mxu0 %v216
      %v306 = vpop.f32.mrb[0].mxu0
      %v307 = vadd.f32 %v238, %v306
      %v308 = vpop.f32.mrb[0].mxu0
      %309 = vdwg.mxu0
      %v310 = vmax.f32 %v307, 0.0
      %v311 = vld [vmem:[#allocation11] sm:$0xff]
      %v312 = vld [vmem:[#allocation11 + $0x8] sm:$0xff]
      %v313 = vld [vmem:[#allocation11 + $0x10] sm:$0xff]
      %v314 = vld [vmem:[#allocation11 + $0x18] sm:$0xff]
      %v315 = vld [vmem:[#allocation11 + $0x20] sm:$0xff]
      %v316 = vld [vmem:[#allocation11 + $0x28] sm:$0xff]
      %v317 = vld [vmem:[#allocation11 + $0x30] sm:$0xff]
      %v318 = vld [vmem:[#allocation11 + $0x38] sm:$0xff]
      %v319 = vld [vmem:[#allocation11 + $0x40] sm:$0xff]
      %v320 = vld [vmem:[#allocation11 + $0x48] sm:$0xff]
      %v321 = vld [vmem:[#allocation11 + $0x50] sm:$0xff]
      %v322 = vld [vmem:[#allocation11 + $0x58] sm:$0xff]
      %v323 = vld [vmem:[#allocation11 + $0x60] sm:$0xff]
      %v324 = vld [vmem:[#allocation11 + $0x68] sm:$0xff]
      %v325 = vld [vmem:[#allocation11 + $0x70] sm:$0xff]
      %v326 = vld [vmem:[#allocation11 + $0x78] sm:$0xff]
      %v327 = vld [vmem:[#allocation12] sm:$0x1]
      %v329 = vlaneseq
      %v330 = vshrl.u32 %v329, 7
      %v331 = vsub.s32 0, %v330
      %v332 = vrot.slane %v327, %v331
      %334 = vmatprep.subr.mxu0 0.0
      %335 = vmatpush1.msra.mxu0 %v311
      %336 = vmatprep.subr.mxu0 0.0
      %337 = vmatpush1.msra.mxu0 %v312
      %338 = vmatprep.subr.mxu0 0.0
      %339 = vmatpush1.msra.mxu0 %v313
      %340 = vmatprep.subr.mxu0 0.0
      %341 = vmatpush1.msra.mxu0 %v314
      %342 = vmatprep.subr.mxu0 0.0
      %343 = vmatpush1.msra.mxu0 %v315
      %344 = vmatprep.subr.mxu0 0.0
      %345 = vmatpush1.msra.mxu0 %v316
      %346 = vmatprep.subr.mxu0 0.0
      %347 = vmatpush1.msra.mxu0 %v317
      %348 = vmatprep.subr.mxu0 0.0
      %349 = vmatpush1.msra.mxu0 %v318
      %350 = vmatprep.subr.mxu0 0.0
      %351 = vmatpush1.msra.mxu0 %v319
      %352 = vmatprep.subr.mxu0 0.0
      %353 = vmatpush1.msra.mxu0 %v320
      %354 = vmatprep.subr.mxu0 0.0
      %355 = vmatpush1.msra.mxu0 %v321
      %356 = vmatprep.subr.mxu0 0.0
      %357 = vmatpush1.msra.mxu0 %v322
      %358 = vmatprep.subr.mxu0 0.0
      %359 = vmatpush1.msra.mxu0 %v323
      %360 = vmatprep.subr.mxu0 0.0
      %361 = vmatpush1.msra.mxu0 %v324
      %362 = vmatprep.subr.mxu0 0.0
      %363 = vmatpush1.msra.mxu0 %v325
      %364 = vmatprep.subr.mxu0 0.0
      %365 = vmatpush1.msra.mxu0 %v326
      %366 = vmatprep.subr.mxu0 0.0
      %367 = vmatpush1.msra.mxu0 0.0
      %368 = vmatprep.subr.mxu0 0.0
      %369 = vmatpush1.msra.mxu0 0.0
      %370 = vmatprep.subr.mxu0 0.0
      %371 = vmatpush1.msra.mxu0 0.0
      %372 = vmatprep.subr.mxu0 0.0
      %373 = vmatpush1.msra.mxu0 0.0
      %374 = vmatprep.subr.mxu0 0.0
      %375 = vmatpush1.msra.mxu0 0.0
      %376 = vmatprep.subr.mxu0 0.0
      %377 = vmatpush1.msra.mxu0 0.0
      %378 = vmatprep.subr.mxu0 0.0
      %379 = vmatpush1.msra.mxu0 0.0
      %380 = vmatprep.subr.mxu0 0.0
      %381 = vmatpush1.msra.mxu0 0.0
      %382 = vmatprep.subr.mxu0 0.0
      %383 = vmatpush1.msra.mxu0 0.0
      %384 = vmatprep.subr.mxu0 0.0
      %385 = vmatpush1.msra.mxu0 0.0
      %386 = vmatprep.subr.mxu0 0.0
      %387 = vmatpush1.msra.mxu0 0.0
      %388 = vmatprep.subr.mxu0 0.0
      %389 = vmatpush1.msra.mxu0 0.0
      %390 = vmatprep.subr.mxu0 0.0
      %391 = vmatpush1.msra.mxu0 0.0
      %392 = vmatprep.subr.mxu0 0.0
      %393 = vmatpush1.msra.mxu0 0.0
      %394 = vmatprep.subr.mxu0 0.0
      %395 = vmatpush1.msra.mxu0 0.0
      %396 = vmatprep.subr.mxu0 0.0
      %397 = vmatpush1.msra.mxu0 0.0
      %398 = vmatprep.mubr.f32.mxu0 0.0
      %399 = vmatmul.mubr.f32.gmra.mrb[0].mxu0 %v310
      %v400 = vpop.f32.mrb[0].mxu0
      %v401 = vadd.f32 %v332, %v400
      %v402 = vpop.f32.mrb[0].mxu0
      %403 = vdwg.mxu0
      %404 = vst [vmem:[#allocation14] sm:$0xff] %v401
    $region57: #{tpu_custom_call.1} parent=1 // pred_fallthru
      _
    // Predicated region
    $region58: #{tpu_custom_call.1} parent=1 // pred_check
      _
    $region59: #{tpu_custom_call.1} parent=1 // pred_check_branch
      %406 = sbr.rel (0) target = $region61
    $region60: #{tpu_custom_call.1} parent=1 // pred_region
      %s408 = ssub.s32 128, 128
      %409 = vsyncadd [#allocation5], %s408
      %s411 = sshll.u32 [#allocation14], 4
      %s412 = int_to_ptr.vmem [resolvable:$true] %s411
      %414 = dma.vmem_to_hbm [thread:$0]  %s412, 128, %s6, [#allocation5]
    $region61: #{tpu_custom_call.1} parent=1 // pred_fallthru
      _
    // Predicated region
    $region62: #{tpu_custom_call.1} parent=1 // pred_check
      _
    $region63: #{tpu_custom_call.1} parent=1 // pred_check_branch
      %416 = sbr.rel (0) target = $region65
    $region64: #{tpu_custom_call.1} parent=1 // pred_region
      %417 = dma.done [#allocation5], 128
    $region65: #{tpu_custom_call.1} parent=1 // pred_fallthru
      _
    %418 = vsyncpa [#allocation4], 1
    %419 = vsyncpa [#allocation7], 1
    %420 = vsyncpa [#allocation10], 1
    %421 = vsyncpa [#allocation13], 1
    %422 = vsyncpa [#allocation5], 1

</llo_original>
